<compile_context>
chip_gen: v7x
topology: tpu7x:2x2x1
jax: 0.10.0
libtpu: 0.0.40
codegen_flags: <defaults>
</compile_context>

<pallas_src>
import functools

import jax
import jax.numpy as jnp
from jax.experimental import pallas as pl
from jax.experimental.pallas import tpu as pltpu


def _round_up(x, m):
    return (x + m - 1) // m * m


def _actor_kernel(x_ref, w1_ref, b1_ref, w2_ref, b2_ref, w3_ref, b3_ref,
                  probs_ref):
    # Cast the state tile to bf16 in-kernel (MXU-native); accumulate in f32.
    x = x_ref[...].astype(jnp.bfloat16)

    # ---- fc1 + ReLU ----
    h1 = jnp.dot(x, w1_ref[...], preferred_element_type=jnp.float32)
    h1 = jnp.maximum(h1 + b1_ref[...], 0.0).astype(jnp.bfloat16)

    # ---- fc2 + ReLU ----
    h2 = jnp.dot(h1, w2_ref[...], preferred_element_type=jnp.float32)
    h2 = jnp.maximum(h2 + b2_ref[...], 0.0).astype(jnp.bfloat16)

    # ---- fc3 (logits at real action width) ----
    logits = jnp.dot(h2, w3_ref[...], preferred_element_type=jnp.float32)
    logits = logits + b3_ref[...]

    # ---- numerically stable softmax, exact normalization ----
    m = jnp.max(logits, axis=-1, keepdims=True)
    e = jnp.exp(logits - m)
    denom = jnp.sum(e, axis=-1, keepdims=True)
    probs_ref[...] = e / denom


def pack_params(w1, b1, w2, b2, w3, b3):
    """One-time packing of nn.Linear params for the kernel.

    Weights: (in_features, out_features) bf16.  Biases: (1, out_features) f32.
    Call this once (at init / after each optimizer step), NOT per forward.
    """
    def pack(w, b):
        return w.astype(jnp.bfloat16), b.astype(jnp.float32).reshape(1, -1)

    w1p, b1p = pack(w1, b1)
    w2p, b2p = pack(w2, b2)
    w3p, b3p = pack(w3, b3)
    return w1p, b1p, w2p, b2p, w3p, b3p


def _pick_tile(orig_b, block_b):
    """Static batch-tile size: 16-row aligned, >=2 grid steps when possible."""
    b16 = _round_up(orig_b, 16)
    if b16 <= 16:
        tile_b = b16                       # tiny batch: single step
    else:
        # Split into at least two steps so v7x's second TensorCore gets work;
        # block_b caps the tile for large batches (amortizes ~0.35us/step).
        tile_b = _round_up(-(-b16 // 2), 16)
    return min(tile_b, block_b)


@functools.partial(jax.jit, static_argnames=("block_b",))
def actor_forward(state, w1, b1, w2, b2, w3, b3, *, block_b=1024):
    """Forward pass. Expects params already packed with pack_params()."""
    orig_b, in_dims = state.shape
    fc1 = w1.shape[1]
    fc2 = w2.shape[1]
    n_actions = w3.shape[1]

    tile_b = _pick_tile(orig_b, block_b)
    b_pad = _round_up(orig_b, tile_b)

    # Row-only padding (no lane inflation); skipped entirely when aligned.
    if b_pad != orig_b:
        x = jnp.pad(state, ((0, b_pad - orig_b), (0, 0)))
    else:
        x = state

    probs = pl.pallas_call(
        _actor_kernel,
        out_shape=jax.ShapeDtypeStruct((b_pad, n_actions), jnp.float32),
        grid=(b_pad // tile_b,),
        in_specs=[
            pl.BlockSpec((tile_b, in_dims), lambda i: (i, 0)),  # state tile
            pl.BlockSpec((in_dims, fc1), lambda i: (0, 0)),     # w1 (resident)
            pl.BlockSpec((1, fc1), lambda i: (0, 0)),           # b1
            pl.BlockSpec((fc1, fc2), lambda i: (0, 0)),         # w2
            pl.BlockSpec((1, fc2), lambda i: (0, 0)),           # b2
            pl.BlockSpec((fc2, n_actions), lambda i: (0, 0)),   # w3
            pl.BlockSpec((1, n_actions), lambda i: (0, 0)),     # b3
        ],
        out_specs=pl.BlockSpec((tile_b, n_actions), lambda i: (i, 0)),
        compiler_params=pltpu.CompilerParams(
            dimension_semantics=("parallel",)),
    )(x, w1, b1, w2, b2, w3, b3)

    if b_pad != orig_b:
        probs = probs[:orig_b]
    return probs


def init_params(key, input_dims, fc1_dims, fc2_dims, n_actions):
    """Deterministic synthetic init (PyTorch-Linear-like uniform fan-in)."""
    ks = jax.random.split(key, 6)

    def linear(kw, kb, fan_in, fan_out):
        bound = 1.0 / jnp.sqrt(fan_in)
        w = jax.random.uniform(kw, (fan_in, fan_out), jnp.float32, -bound, bound)
        b = jax.random.uniform(kb, (fan_out,), jnp.float32, -bound, bound)
        return w, b

    w1, b1 = linear(ks[0], ks[1], input_dims, fc1_dims)
    w2, b2 = linear(ks[2], ks[3], fc1_dims, fc2_dims)
    w3, b3 = linear(ks[4], ks[5], fc2_dims, n_actions)
    return w1, b1, w2, b2, w3, b3


if __name__ == "__main__":
    key = jax.random.PRNGKey(0)
    k_state, k_params = jax.random.split(key)

    batch = 8
    input_dims = 32
    fc1_dims = 256
    fc2_dims = 256
    n_actions = 8

    state = jax.random.normal(k_state, (batch, input_dims), dtype=jnp.float32)
    raw_params = init_params(k_params, input_dims, fc1_dims, fc2_dims, n_actions)

    # Pack weights ONCE (outside the per-step forward path).
    packed = pack_params(*raw_params)

    probs = actor_forward(state, *packed)
    probs = jax.block_until_ready(probs)

    # Sanity: rows of a Categorical's probs must sum to 1 and be non-negative.
    row_sums = jnp.sum(probs, axis=-1)
    assert probs.shape == (batch, n_actions)
    assert bool(jnp.all(probs >= 0.0))
    assert bool(jnp.allclose(row_sums, 1.0, atol=1e-5))

    # Cross-check against a pure-JAX f32 reference (bf16 weights => looser tol).
    w1, b1, w2, b2, w3, b3 = raw_params
    h1 = jnp.maximum(state @ w1 + b1, 0.0)
    h2 = jnp.maximum(h1 @ w2 + b2, 0.0)
    ref_f32 = jax.nn.softmax(h2 @ w3 + b3, axis=-1)
    assert bool(jnp.allclose(probs, ref_f32, atol=3e-2))

    # Cross-check against a bf16-matched JAX reference (tight tolerance).
    xb = state.astype(jnp.bfloat16)
    h1b = jnp.maximum(
        jnp.dot(xb, w1.astype(jnp.bfloat16),
                preferred_element_type=jnp.float32) + b1, 0.0
    ).astype(jnp.bfloat16)
    h2b = jnp.maximum(
        jnp.dot(h1b, w2.astype(jnp.bfloat16),
                preferred_element_type=jnp.float32) + b2, 0.0
    ).astype(jnp.bfloat16)
    ref_bf16 = jax.nn.softmax(
        jnp.dot(h2b, w3.astype(jnp.bfloat16),
                preferred_element_type=jnp.float32) + b3, axis=-1)
    assert bool(jnp.allclose(probs, ref_bf16, atol=5e-3))

    print("KERNEL_OK")
</pallas_src>

<mosaic_0001>
module attributes {stable_mosaic.version = 11 : i64} {
  func.func @_actor_kernel(%arg0: i32, %arg1: memref<16x32xf32, #tpu.memory_space<vmem>>, %arg2: memref<32x256xbf16, #tpu.memory_space<vmem>>, %arg3: memref<1x256xf32, #tpu.memory_space<vmem>>, %arg4: memref<256x256xbf16, #tpu.memory_space<vmem>>, %arg5: memref<1x256xf32, #tpu.memory_space<vmem>>, %arg6: memref<256x8xbf16, #tpu.memory_space<vmem>>, %arg7: memref<1x8xf32, #tpu.memory_space<vmem>>, %arg8: memref<16x8xf32, #tpu.memory_space<vmem>>) attributes {dimension_semantics = [#tpu.dimension_semantics<parallel>], iteration_bounds = array<i64: 1>, scalar_prefetch = 0 : i64, scratch_operands = 0 : i64, tpu.core_type = #tpu.core_type<tc>, window_params = [{transform_indices = @transform_0, window_bounds = array<i64: 16, 32>}, {pipeline_mode = #tpu.pipeline_mode<synchronous>, transform_indices = @transform_1, window_bounds = array<i64: 32, 256>}, {pipeline_mode = #tpu.pipeline_mode<synchronous>, transform_indices = @transform_2, window_bounds = array<i64: 1, 256>}, {pipeline_mode = #tpu.pipeline_mode<synchronous>, transform_indices = @transform_3, window_bounds = array<i64: 256, 256>}, {pipeline_mode = #tpu.pipeline_mode<synchronous>, transform_indices = @transform_4, window_bounds = array<i64: 1, 256>}, {pipeline_mode = #tpu.pipeline_mode<synchronous>, transform_indices = @transform_5, window_bounds = array<i64: 256, 8>}, {pipeline_mode = #tpu.pipeline_mode<synchronous>, transform_indices = @transform_6, window_bounds = array<i64: 1, 8>}, {transform_indices = @transform_7, window_bounds = array<i64: 16, 8>}]} {
    %c0 = arith.constant 0 : index
    %c0_0 = arith.constant 0 : index
    %0 = vector.load %arg1[%c0, %c0_0] : memref<16x32xf32, #tpu.memory_space<vmem>>, vector<16x32xf32>
    %1 = arith.truncf %0 : vector<16x32xf32> to vector<16x32xbf16>
    %c0_1 = arith.constant 0 : index
    %c0_2 = arith.constant 0 : index
    %2 = vector.load %arg2[%c0_1, %c0_2] : memref<32x256xbf16, #tpu.memory_space<vmem>>, vector<32x256xbf16>
    %cst = arith.constant dense<0.000000e+00> : vector<16x256xf32>
    %3 = tpu.matmul %1, %2, %cst {dimension_numbers = #tpu.dot_dimension_numbers<[1], [0], [0], [1], [0, 0, 1, 1], [], []>} : vector<16x32xbf16>, vector<32x256xbf16>, vector<16x256xf32> -> vector<16x256xf32>
    %c0_3 = arith.constant 0 : index
    %c0_4 = arith.constant 0 : index
    %4 = vector.load %arg3[%c0_3, %c0_4] : memref<1x256xf32, #tpu.memory_space<vmem>>, vector<1x256xf32>
    %5 = vector.broadcast %4 : vector<1x256xf32> to vector<16x256xf32>
    %6 = arith.addf %3, %5 : vector<16x256xf32>
    %cst_5 = arith.constant 0.000000e+00 : f32
    %7 = vector.broadcast %cst_5 : f32 to vector<16x256xf32>
    %8 = arith.maximumf %6, %7 : vector<16x256xf32>
    %9 = arith.truncf %8 : vector<16x256xf32> to vector<16x256xbf16>
    %c0_6 = arith.constant 0 : index
    %c0_7 = arith.constant 0 : index
    %10 = vector.load %arg4[%c0_6, %c0_7] : memref<256x256xbf16, #tpu.memory_space<vmem>>, vector<256x256xbf16>
    %cst_8 = arith.constant dense<0.000000e+00> : vector<16x256xf32>
    %11 = tpu.matmul %9, %10, %cst_8 {dimension_numbers = #tpu.dot_dimension_numbers<[1], [0], [0], [1], [0, 0, 1, 1], [], []>} : vector<16x256xbf16>, vector<256x256xbf16>, vector<16x256xf32> -> vector<16x256xf32>
    %c0_9 = arith.constant 0 : index
    %c0_10 = arith.constant 0 : index
    %12 = vector.load %arg5[%c0_9, %c0_10] : memref<1x256xf32, #tpu.memory_space<vmem>>, vector<1x256xf32>
    %13 = vector.broadcast %12 : vector<1x256xf32> to vector<16x256xf32>
    %14 = arith.addf %11, %13 : vector<16x256xf32>
    %cst_11 = arith.constant 0.000000e+00 : f32
    %15 = vector.broadcast %cst_11 : f32 to vector<16x256xf32>
    %16 = arith.maximumf %14, %15 : vector<16x256xf32>
    %17 = arith.truncf %16 : vector<16x256xf32> to vector<16x256xbf16>
    %c0_12 = arith.constant 0 : index
    %c0_13 = arith.constant 0 : index
    %18 = vector.load %arg6[%c0_12, %c0_13] : memref<256x8xbf16, #tpu.memory_space<vmem>>, vector<256x8xbf16>
    %cst_14 = arith.constant dense<0.000000e+00> : vector<16x8xf32>
    %19 = tpu.matmul %17, %18, %cst_14 {dimension_numbers = #tpu.dot_dimension_numbers<[1], [0], [0], [1], [0, 0, 1, 1], [], []>} : vector<16x256xbf16>, vector<256x8xbf16>, vector<16x8xf32> -> vector<16x8xf32>
    %c0_15 = arith.constant 0 : index
    %c0_16 = arith.constant 0 : index
    %20 = vector.load %arg7[%c0_15, %c0_16] : memref<1x8xf32, #tpu.memory_space<vmem>>, vector<1x8xf32>
    %21 = vector.broadcast %20 : vector<1x8xf32> to vector<16x8xf32>
    %22 = arith.addf %19, %21 : vector<16x8xf32>
    %cst_17 = arith.constant dense<0xFF800000> : vector<16xf32>
    %23 = vector.multi_reduction <maximumf>, %22, %cst_17 [1] : vector<16x8xf32> to vector<16xf32>
    %24 = vector.shape_cast %23 : vector<16xf32> to vector<16x1xf32>
    %25 = vector.broadcast %24 : vector<16x1xf32> to vector<16x8xf32>
    %26 = arith.subf %22, %25 : vector<16x8xf32>
    %27 = math.exp %26 : vector<16x8xf32>
    %cst_18 = arith.constant dense<0.000000e+00> : vector<16xf32>
    %28 = vector.multi_reduction <add>, %27, %cst_18 [1] : vector<16x8xf32> to vector<16xf32>
    %29 = vector.shape_cast %28 : vector<16xf32> to vector<16x1xf32>
    %30 = vector.broadcast %29 : vector<16x1xf32> to vector<16x8xf32>
    %31 = arith.divf %27, %30 : vector<16x8xf32>
    %c0_19 = arith.constant 0 : index
    %c0_20 = arith.constant 0 : index
    %32 = vector.load %arg8[%c0_19, %c0_20] : memref<16x8xf32, #tpu.memory_space<vmem>>, vector<16x8xf32>
    tpu.vector_store %arg8[%c0_19, %c0_20], %31 {strides = array<i32>} : memref<16x8xf32, #tpu.memory_space<vmem>>, vector<16x8xf32>,
    return
  }
  func.func @transform_0(%arg0: i32) -> (i32, i32) {
    %c0_i32 = arith.constant 0 : i32
    %c0_i32_0 = arith.constant 0 : i32
    return %arg0, %c0_i32 : i32, i32
  }
  func.func @transform_1(%arg0: i32) -> (i32, i32) {
    %c0_i32 = arith.constant 0 : i32
    %c0_i32_0 = arith.constant 0 : i32
    %c0_i32_1 = arith.constant 0 : i32
    return %c0_i32, %c0_i32_0 : i32, i32
  }
  func.func @transform_2(%arg0: i32) -> (i32, i32) {
    %c0_i32 = arith.constant 0 : i32
    %c0_i32_0 = arith.constant 0 : i32
    %c0_i32_1 = arith.constant 0 : i32
    return %c0_i32, %c0_i32_0 : i32, i32
  }
  func.func @transform_3(%arg0: i32) -> (i32, i32) {
    %c0_i32 = arith.constant 0 : i32
    %c0_i32_0 = arith.constant 0 : i32
    %c0_i32_1 = arith.constant 0 : i32
    return %c0_i32, %c0_i32_0 : i32, i32
  }
  func.func @transform_4(%arg0: i32) -> (i32, i32) {
    %c0_i32 = arith.constant 0 : i32
    %c0_i32_0 = arith.constant 0 : i32
    %c0_i32_1 = arith.constant 0 : i32
    return %c0_i32, %c0_i32_0 : i32, i32
  }
  func.func @transform_5(%arg0: i32) -> (i32, i32) {
    %c0_i32 = arith.constant 0 : i32
    %c0_i32_0 = arith.constant 0 : i32
    %c0_i32_1 = arith.constant 0 : i32
    return %c0_i32, %c0_i32_0 : i32, i32
  }
  func.func @transform_6(%arg0: i32) -> (i32, i32) {
    %c0_i32 = arith.constant 0 : i32
    %c0_i32_0 = arith.constant 0 : i32
    %c0_i32_1 = arith.constant 0 : i32
    return %c0_i32, %c0_i32_0 : i32, i32
  }
  func.func @transform_7(%arg0: i32) -> (i32, i32) {
    %c0_i32 = arith.constant 0 : i32
    %c0_i32_0 = arith.constant 0 : i32
    return %arg0, %c0_i32 : i32, i32
  }
}

</mosaic_0001>

<llo_original>
// kernel: actor_forward.1
$region0: #{actor_forward.1}
  #allocation0 [shape = 'u32[]', space=smem, size = 0x4, offset = 0x4, fixed_abs, tag = 'smem constant byte address 0x4 - core index']
  #allocation1 [shape = 'u32[144,128]{1,0:T(1,128)}', space=vmem, size = 0x12000, scoped, tag = 'internal scratch']
  %s0 = inlined_call_operand.vmem [shape: f32[16,32], index: 0, kind: input, shape index: {}]
  %s1 = inlined_call_operand.vmem [shape: bf16[32,256], index: 1, kind: input, shape index: {}]
  %s2 = inlined_call_operand.vmem [shape: f32[1,256], index: 2, kind: input, shape index: {}]
  %s3 = inlined_call_operand.hbm [shape: bf16[256,256], index: 3, kind: input, shape index: {}]
  %s4 = inlined_call_operand.vmem [shape: f32[1,256], index: 4, kind: input, shape index: {}]
  %s5 = inlined_call_operand.vmem [shape: bf16[256,8], index: 5, kind: input, shape index: {}]
  %s6 = inlined_call_operand.vmem [shape: f32[1,8], index: 6, kind: input, shape index: {}]
  %s7 = inlined_call_operand.vmem [shape: f32[16,8], index: 7, kind: output, shape index: {}]
  %s8 = sld [smem:[#allocation0]]
  $region42: #{actor_forward.1} parent=0
    _
  %s10 = ssub.s32 1, %s8
  %s11 = scalar_select 0, %s10, %s8
  $region1: #{actor_forward.1} parent=0
    #allocation2 [shape = 'u8[131072]{0}', space=vmem, size = 0x20000, scoped, tag = 'input window, operand 3, single buffered']
    #allocation3 [shape = 's32[1]{0}', space=sflag, size = 0x4, scoped, tag = 'scoped memory for actor_forward.1']
    %12 = vsyncpa [#allocation3], 0
    // Predicated region
    $region2: #{actor_forward.1} parent=1 // pred_check
      _
    $region3: #{actor_forward.1} parent=1 // pred_check_branch
      %14 = sbr.rel (0) target = $region5
    $region4: #{actor_forward.1} parent=1 // pred_region
      _
    $region5: #{actor_forward.1} parent=1 // pred_fallthru
      _
    // Predicated region
    $region6: #{actor_forward.1} parent=1 // pred_check
      _
    $region7: #{actor_forward.1} parent=1 // pred_check_branch
      %16 = sbr.rel (0) target = $region9
    $region8: #{actor_forward.1} parent=1 // pred_region
      _
    $region9: #{actor_forward.1} parent=1 // pred_fallthru
      _
    // Predicated region
    $region10: #{actor_forward.1} parent=1 // pred_check
      _
    $region11: #{actor_forward.1} parent=1 // pred_check_branch
      %18 = sbr.rel (0) target = $region13
    $region12: #{actor_forward.1} parent=1 // pred_region
      _
    $region13: #{actor_forward.1} parent=1 // pred_fallthru
      _
    // Predicated region
    $region14: #{actor_forward.1} parent=1 // pred_check
      _
    $region15: #{actor_forward.1} parent=1 // pred_check_branch
      %20 = sbr.rel (0) target = $region17
    $region16: #{actor_forward.1} parent=1 // pred_region
      %s22 = ssub.s32 4096, 4096
      %23 = vsyncadd [#allocation3], %s22
      %s24 = sshll.u32 [#allocation2], 4
      %s25 = int_to_ptr.vmem [resolvable:$true] %s24
      %30 = dma.hbm_to_vmem [thread:$0]  %s3, 4096, %s25, [#allocation3], 128, 128, 8
    $region17: #{actor_forward.1} parent=1 // pred_fallthru
      _
    // Predicated region
    $region18: #{actor_forward.1} parent=1 // pred_check
      _
    $region19: #{actor_forward.1} parent=1 // pred_check_branch
      %32 = sbr.rel (0) target = $region21
    $region20: #{actor_forward.1} parent=1 // pred_region
      _
    $region21: #{actor_forward.1} parent=1 // pred_fallthru
      _
    // Predicated region
    $region22: #{actor_forward.1} parent=1 // pred_check
      _
    $region23: #{actor_forward.1} parent=1 // pred_check_branch
      %34 = sbr.rel (0) target = $region25
    $region24: #{actor_forward.1} parent=1 // pred_region
      _
    $region25: #{actor_forward.1} parent=1 // pred_fallthru
      _
    // Predicated region
    $region26: #{actor_forward.1} parent=1 // pred_check
      _
    $region27: #{actor_forward.1} parent=1 // pred_check_branch
      %36 = sbr.rel (0) target = $region29
    $region28: #{actor_forward.1} parent=1 // pred_region
      _
    $region29: #{actor_forward.1} parent=1 // pred_fallthru
      _
    // Predicated region
    $region30: #{actor_forward.1} parent=1 // pred_check
      _
    $region31: #{actor_forward.1} parent=1 // pred_check_branch
      %38 = sbr.rel (0) target = $region33
    $region32: #{actor_forward.1} parent=1 // pred_region
      %39 = dma.done [#allocation3], 4096
    $region33: #{actor_forward.1} parent=1 // pred_fallthru
      _
    %v41 = vld [vmem:[%s0] sm:$0xff]
    %v42 = vld [vmem:[%s0 + $0x8] sm:$0xff]
    %v43 = vpack.c.bf16 %v42, %v41
    %v44 = vld [vmem:[%s1] sm:$0xff]
    %v45 = vld [vmem:[%s1 + $0x8] sm:$0xff]
    %v46 = vld [vmem:[%s1 + $0x10] sm:$0xff]
    %v47 = vld [vmem:[%s1 + $0x18] sm:$0xff]
    %v48 = vld [vmem:[%s2] sm:$0x3]
    %v50 = vlaneseq
    %v51 = vshrl.u32 %v50, 7
    %v52 = vsub.s32 0, %v51
    %v53 = vrot.slane %v48, %v52
    %v54 = vlaneseq
    %v55 = vshrl.u32 %v54, 7
    %v56 = vsub.s32 1, %v55
    %v57 = vrot.slane %v48, %v56
    %v64 = vunpack.c.l.b16 %v44
    %v65 = vunpack.c.h.b16 %v44
    %v66 = vunpack.c.l.b16 %v45
    %v67 = vunpack.c.h.b16 %v45
    %v68 = vunpack.c.l.b16 %v46
    %v69 = vunpack.c.h.b16 %v46
    %v70 = vunpack.c.l.b16 %v47
    %v71 = vunpack.c.h.b16 %v47
    %v72 = vpack.c.b16 %v66, %v64
    %v73 = vpack.c.b16 %v67, %v65
    %v74 = vpack.c.b16 %v70, %v68
    %v75 = vpack.c.b16 %v71, %v69
    %vm80 = vcmask 261120
    %v82 = vsel %vm80, %v43, 0
    %84 = vmatprep.subr.bf16.mxu0 %v73
    %85 = vmatpush1.bf16.msra.mxu0 %v72
    %86 = vmatprep.subr.bf16.mxu0 %v75
    %87 = vmatpush1.bf16.msra.mxu0 %v74
    %88 = vmatprep.subr.bf16.mxu0 0
    %89 = vmatpush1.bf16.msra.mxu0 0
    %90 = vmatprep.subr.bf16.mxu0 0
    %91 = vmatpush1.bf16.msra.mxu0 0
    %92 = vmatprep.subr.bf16.mxu0 0
    %93 = vmatpush1.bf16.msra.mxu0 0
    %94 = vmatprep.subr.bf16.mxu0 0
    %95 = vmatpush1.bf16.msra.mxu0 0
    %96 = vmatprep.subr.bf16.mxu0 0
    %97 = vmatpush1.bf16.msra.mxu0 0
    %98 = vmatprep.subr.bf16.mxu0 0
    %99 = vmatpush1.bf16.msra.mxu0 0
    %100 = vmatprep.subr.bf16.mxu0 0
    %101 = vmatpush1.bf16.msra.mxu0 0
    %102 = vmatprep.subr.bf16.mxu0 0
    %103 = vmatpush1.bf16.msra.mxu0 0
    %104 = vmatprep.subr.bf16.mxu0 0
    %105 = vmatpush1.bf16.msra.mxu0 0
    %106 = vmatprep.subr.bf16.mxu0 0
    %107 = vmatpush1.bf16.msra.mxu0 0
    %108 = vmatprep.subr.bf16.mxu0 0
    %109 = vmatpush1.bf16.msra.mxu0 0
    %110 = vmatprep.subr.bf16.mxu0 0
    %111 = vmatpush1.bf16.msra.mxu0 0
    %112 = vmatprep.subr.bf16.mxu0 0
    %113 = vmatpush1.bf16.msra.mxu0 0
    %114 = vmatprep.subr.bf16.mxu0 0
    %115 = vmatpush1.bf16.msra.mxu0 0
    %116 = vmatprep.mubr.bf16.mxu0 0
    %117 = vmatmul.mubr.bf16.gmra.mrb[0].mxu0 %v82
    %v118 = vpop.f32.mrb[0].mxu0
    %v119 = vadd.f32 %v53, %v118
    %v120 = vpop.f32.mrb[0].mxu0
    %v121 = vadd.f32 %v57, %v120
    %v122 = vpop.f32.mrb[0].mxu0
    %v123 = vadd.f32 %v53, %v122
    %v124 = vpop.f32.mrb[0].mxu0
    %v125 = vadd.f32 %v57, %v124
    %126 = vdwg.mxu0
    %v127 = vmax.f32 %v119, 0.0
    %v128 = vmax.f32 %v121, 0.0
    %v129 = vmax.f32 %v123, 0.0
    %v130 = vmax.f32 %v125, 0.0
    %v131 = vpack.c.bf16 %v129, %v127
    %v132 = vpack.c.bf16 %v130, %v128
    %v133 = vld [vmem:[#allocation2] sm:$0xff]
    %v134 = vld [vmem:[#allocation2 + $0x8] sm:$0xff]
    %v135 = vld [vmem:[#allocation2 + $0x10] sm:$0xff]
    %v136 = vld [vmem:[#allocation2 + $0x18] sm:$0xff]
    %v137 = vld [vmem:[#allocation2 + $0x20] sm:$0xff]
    %v138 = vld [vmem:[#allocation2 + $0x28] sm:$0xff]
    %v139 = vld [vmem:[#allocation2 + $0x30] sm:$0xff]
    %v140 = vld [vmem:[#allocation2 + $0x38] sm:$0xff]
    %v141 = vld [vmem:[#allocation2 + $0x40] sm:$0xff]
    %v142 = vld [vmem:[#allocation2 + $0x48] sm:$0xff]
    %v143 = vld [vmem:[#allocation2 + $0x50] sm:$0xff]
    %v144 = vld [vmem:[#allocation2 + $0x58] sm:$0xff]
    %v145 = vld [vmem:[#allocation2 + $0x60] sm:$0xff]
    %v146 = vld [vmem:[#allocation2 + $0x68] sm:$0xff]
    %v147 = vld [vmem:[#allocation2 + $0x70] sm:$0xff]
    %v148 = vld [vmem:[#allocation2 + $0x78] sm:$0xff]
    %v149 = vld [vmem:[#allocation2 + $0x80] sm:$0xff]
    %v150 = vld [vmem:[#allocation2 + $0x88] sm:$0xff]
    %v151 = vld [vmem:[#allocation2 + $0x90] sm:$0xff]
    %v152 = vld [vmem:[#allocation2 + $0x98] sm:$0xff]
    %v153 = vld [vmem:[#allocation2 + $0xa0] sm:$0xff]
    %v154 = vld [vmem:[#allocation2 + $0xa8] sm:$0xff]
    %v155 = vld [vmem:[#allocation2 + $0xb0] sm:$0xff]
    %v156 = vld [vmem:[#allocation2 + $0xb8] sm:$0xff]
    %v157 = vld [vmem:[#allocation2 + $0xc0] sm:$0xff]
    %v158 = vld [vmem:[#allocation2 + $0xc8] sm:$0xff]
    %v159 = vld [vmem:[#allocation2 + $0xd0] sm:$0xff]
    %v160 = vld [vmem:[#allocation2 + $0xd8] sm:$0xff]
    %v161 = vld [vmem:[#allocation2 + $0xe0] sm:$0xff]
    %v162 = vld [vmem:[#allocation2 + $0xe8] sm:$0xff]
    %v163 = vld [vmem:[#allocation2 + $0xf0] sm:$0xff]
    %v164 = vld [vmem:[#allocation2 + $0xf8] sm:$0xff]
    %v165 = vld [vmem:[%s4] sm:$0x3]
    %v167 = vlaneseq
    %v168 = vshrl.u32 %v167, 7
    %v169 = vsub.s32 0, %v168
    %v170 = vrot.slane %v165, %v169
    %v171 = vlaneseq
    %v172 = vshrl.u32 %v171, 7
    %v173 = vsub.s32 1, %v172
    %v174 = vrot.slane %v165, %v173
    %v209 = vunpack.c.l.b16 %v133
    %v210 = vunpack.c.h.b16 %v133
    %v211 = vunpack.c.l.b16 %v134
    %v212 = vunpack.c.h.b16 %v134
    %v213 = vunpack.c.l.b16 %v135
    %v214 = vunpack.c.h.b16 %v135
    %v215 = vunpack.c.l.b16 %v136
    %v216 = vunpack.c.h.b16 %v136
    %v217 = vunpack.c.l.b16 %v137
    %v218 = vunpack.c.h.b16 %v137
    %v219 = vunpack.c.l.b16 %v138
    %v220 = vunpack.c.h.b16 %v138
    %v221 = vunpack.c.l.b16 %v139
    %v222 = vunpack.c.h.b16 %v139
    %v223 = vunpack.c.l.b16 %v140
    %v224 = vunpack.c.h.b16 %v140
    %v225 = vunpack.c.l.b16 %v141
    %v226 = vunpack.c.h.b16 %v141
    %v227 = vunpack.c.l.b16 %v142
    %v228 = vunpack.c.h.b16 %v142
    %v229 = vunpack.c.l.b16 %v143
    %v230 = vunpack.c.h.b16 %v143
    %v231 = vunpack.c.l.b16 %v144
    %v232 = vunpack.c.h.b16 %v144
    %v233 = vunpack.c.l.b16 %v145
    %v234 = vunpack.c.h.b16 %v145
    %v235 = vunpack.c.l.b16 %v146
    %v236 = vunpack.c.h.b16 %v146
    %v237 = vunpack.c.l.b16 %v147
    %v238 = vunpack.c.h.b16 %v147
    %v239 = vunpack.c.l.b16 %v148
    %v240 = vunpack.c.h.b16 %v148
    %v241 = vunpack.c.l.b16 %v149
    %v242 = vunpack.c.h.b16 %v149
    %v243 = vunpack.c.l.b16 %v150
    %v244 = vunpack.c.h.b16 %v150
    %v245 = vunpack.c.l.b16 %v151
    %v246 = vunpack.c.h.b16 %v151
    %v247 = vunpack.c.l.b16 %v152
    %v248 = vunpack.c.h.b16 %v152
    %v249 = vunpack.c.l.b16 %v153
    %v250 = vunpack.c.h.b16 %v153
    %v251 = vunpack.c.l.b16 %v154
    %v252 = vunpack.c.h.b16 %v154
    %v253 = vunpack.c.l.b16 %v155
    %v254 = vunpack.c.h.b16 %v155
    %v255 = vunpack.c.l.b16 %v156
    %v256 = vunpack.c.h.b16 %v156
    %v257 = vunpack.c.l.b16 %v157
    %v258 = vunpack.c.h.b16 %v157
    %v259 = vunpack.c.l.b16 %v158
    %v260 = vunpack.c.h.b16 %v158
    %v261 = vunpack.c.l.b16 %v159
    %v262 = vunpack.c.h.b16 %v159
    %v263 = vunpack.c.l.b16 %v160
    %v264 = vunpack.c.h.b16 %v160
    %v265 = vunpack.c.l.b16 %v161
    %v266 = vunpack.c.h.b16 %v161
    %v267 = vunpack.c.l.b16 %v162
    %v268 = vunpack.c.h.b16 %v162
    %v269 = vunpack.c.l.b16 %v163
    %v270 = vunpack.c.h.b16 %v163
    %v271 = vunpack.c.l.b16 %v164
    %v272 = vunpack.c.h.b16 %v164
    %v273 = vpack.c.b16 %v211, %v209
    %v274 = vpack.c.b16 %v212, %v210
    %v275 = vpack.c.b16 %v215, %v213
    %v276 = vpack.c.b16 %v216, %v214
    %v277 = vpack.c.b16 %v219, %v217
    %v278 = vpack.c.b16 %v220, %v218
    %v279 = vpack.c.b16 %v223, %v221
    %v280 = vpack.c.b16 %v224, %v222
    %v281 = vpack.c.b16 %v227, %v225
    %v282 = vpack.c.b16 %v228, %v226
    %v283 = vpack.c.b16 %v231, %v229
    %v284 = vpack.c.b16 %v232, %v230
    %v285 = vpack.c.b16 %v235, %v233
    %v286 = vpack.c.b16 %v236, %v234
    %v287 = vpack.c.b16 %v239, %v237
    %v288 = vpack.c.b16 %v240, %v238
    %v289 = vpack.c.b16 %v243, %v241
    %v290 = vpack.c.b16 %v244, %v242
    %v291 = vpack.c.b16 %v247, %v245
    %v292 = vpack.c.b16 %v248, %v246
    %v293 = vpack.c.b16 %v251, %v249
    %v294 = vpack.c.b16 %v252, %v250
    %v295 = vpack.c.b16 %v255, %v253
    %v296 = vpack.c.b16 %v256, %v254
    %v297 = vpack.c.b16 %v259, %v257
    %v298 = vpack.c.b16 %v260, %v258
    %v299 = vpack.c.b16 %v263, %v261
    %v300 = vpack.c.b16 %v264, %v262
    %v301 = vpack.c.b16 %v267, %v265
    %v302 = vpack.c.b16 %v268, %v266
    %v303 = vpack.c.b16 %v271, %v269
    %v304 = vpack.c.b16 %v272, %v270
    %337 = vmatprep.subr.bf16.mxu0 %v274
    %338 = vmatpush1.bf16.msra.mxu0 %v273
    %339 = vmatprep.subr.bf16.mxu0 %v276
    %340 = vmatpush1.bf16.msra.mxu0 %v275
    %341 = vmatprep.subr.bf16.mxu0 %v278
    %342 = vmatpush1.bf16.msra.mxu0 %v277
    %343 = vmatprep.subr.bf16.mxu0 %v280
    %344 = vmatpush1.bf16.msra.mxu0 %v279
    %345 = vmatprep.subr.bf16.mxu0 %v282
    %346 = vmatpush1.bf16.msra.mxu0 %v281
    %347 = vmatprep.subr.bf16.mxu0 %v284
    %348 = vmatpush1.bf16.msra.mxu0 %v283
    %349 = vmatprep.subr.bf16.mxu0 %v286
    %350 = vmatpush1.bf16.msra.mxu0 %v285
    %351 = vmatprep.subr.bf16.mxu0 %v288
    %352 = vmatpush1.bf16.msra.mxu0 %v287
    %353 = vmatprep.subr.bf16.mxu0 %v290
    %354 = vmatpush1.bf16.msra.mxu0 %v289
    %355 = vmatprep.subr.bf16.mxu0 %v292
    %356 = vmatpush1.bf16.msra.mxu0 %v291
    %357 = vmatprep.subr.bf16.mxu0 %v294
    %358 = vmatpush1.bf16.msra.mxu0 %v293
    %359 = vmatprep.subr.bf16.mxu0 %v296
    %360 = vmatpush1.bf16.msra.mxu0 %v295
    %361 = vmatprep.subr.bf16.mxu0 %v298
    %362 = vmatpush1.bf16.msra.mxu0 %v297
    %363 = vmatprep.subr.bf16.mxu0 %v300
    %364 = vmatpush1.bf16.msra.mxu0 %v299
    %365 = vmatprep.subr.bf16.mxu0 %v302
    %366 = vmatpush1.bf16.msra.mxu0 %v301
    %367 = vmatprep.subr.bf16.mxu0 %v304
    %368 = vmatpush1.bf16.msra.mxu0 %v303
    %369 = vmatprep.mubr.bf16.mxu0 %v132
    %370 = vmatmul.mubr.bf16.gmra.mrb[0].mxu0 %v131
    %v371 = vpop.f32.mrb[0].mxu0
    %v372 = vadd.f32 %v170, %v371
    %v373 = vpop.f32.mrb[0].mxu0
    %v374 = vadd.f32 %v174, %v373
    %v375 = vpop.f32.mrb[0].mxu0
    %v376 = vadd.f32 %v170, %v375
    %v377 = vpop.f32.mrb[0].mxu0
    %v378 = vadd.f32 %v174, %v377
    %379 = vdwg.mxu0
    %v380 = vmax.f32 %v372, 0.0
    %v381 = vmax.f32 %v374, 0.0
    %v382 = vmax.f32 %v376, 0.0
    %v383 = vmax.f32 %v378, 0.0
    %v384 = vpack.c.bf16 %v382, %v380
    %v385 = vpack.c.bf16 %v383, %v381
    %v386 = vld [vmem:[%s5] sm:$0xf]
    %v387 = vld [vmem:[%s5 + $0x4] sm:$0xf]
    %v388 = vld [vmem:[%s5 + $0x8] sm:$0xf]
    %v389 = vld [vmem:[%s5 + $0xc] sm:$0xf]
    %v390 = vld [vmem:[%s5 + $0x10] sm:$0xf]
    %v391 = vld [vmem:[%s5 + $0x14] sm:$0xf]
    %v392 = vld [vmem:[%s5 + $0x18] sm:$0xf]
    %v393 = vld [vmem:[%s5 + $0x1c] sm:$0xf]
    %v394 = vld [vmem:[%s5 + $0x20] sm:$0xf]
    %v395 = vld [vmem:[%s5 + $0x24] sm:$0xf]
    %v396 = vld [vmem:[%s5 + $0x28] sm:$0xf]
    %v397 = vld [vmem:[%s5 + $0x2c] sm:$0xf]
    %v398 = vld [vmem:[%s5 + $0x30] sm:$0xf]
    %v399 = vld [vmem:[%s5 + $0x34] sm:$0xf]
    %v400 = vld [vmem:[%s5 + $0x38] sm:$0xf]
    %v401 = vld [vmem:[%s5 + $0x3c] sm:$0xf]
    %v402 = vld [vmem:[%s5 + $0x40] sm:$0xf]
    %v403 = vld [vmem:[%s5 + $0x44] sm:$0xf]
    %v404 = vld [vmem:[%s5 + $0x48] sm:$0xf]
    %v405 = vld [vmem:[%s5 + $0x4c] sm:$0xf]
    %v406 = vld [vmem:[%s5 + $0x50] sm:$0xf]
    %v407 = vld [vmem:[%s5 + $0x54] sm:$0xf]
    %v408 = vld [vmem:[%s5 + $0x58] sm:$0xf]
    %v409 = vld [vmem:[%s5 + $0x5c] sm:$0xf]
    %v410 = vld [vmem:[%s5 + $0x60] sm:$0xf]
    %v411 = vld [vmem:[%s5 + $0x64] sm:$0xf]
    %v412 = vld [vmem:[%s5 + $0x68] sm:$0xf]
    %v413 = vld [vmem:[%s5 + $0x6c] sm:$0xf]
    %v414 = vld [vmem:[%s5 + $0x70] sm:$0xf]
    %v415 = vld [vmem:[%s5 + $0x74] sm:$0xf]
    %v416 = vld [vmem:[%s5 + $0x78] sm:$0xf]
    %v417 = vld [vmem:[%s5 + $0x7c] sm:$0xf]
    %v418 = vld [vmem:[%s6] sm:$0x1]
    %v420 = vlaneseq
    %v421 = vshrl.u32 %v420, 7
    %v422 = vsub.s32 0, %v421
    %v423 = vrot.slane %v418, %v422
    %v457 = vunpack.c.l.b16 %v386
    %v458 = vunpack.c.l.b16 %v387
    %v459 = vunpack.c.l.b16 %v388
    %v460 = vunpack.c.l.b16 %v389
    %v461 = vunpack.c.l.b16 %v390
    %v462 = vunpack.c.l.b16 %v391
    %v463 = vunpack.c.l.b16 %v392
    %v464 = vunpack.c.l.b16 %v393
    %v465 = vunpack.c.l.b16 %v394
    %v466 = vunpack.c.l.b16 %v395
    %v467 = vunpack.c.l.b16 %v396
    %v468 = vunpack.c.l.b16 %v397
    %v469 = vunpack.c.l.b16 %v398
    %v470 = vunpack.c.l.b16 %v399
    %v471 = vunpack.c.l.b16 %v400
    %v472 = vunpack.c.l.b16 %v401
    %v473 = vunpack.c.l.b16 %v402
    %v474 = vunpack.c.l.b16 %v403
    %v475 = vunpack.c.l.b16 %v404
    %v476 = vunpack.c.l.b16 %v405
    %v477 = vunpack.c.l.b16 %v406
    %v478 = vunpack.c.l.b16 %v407
    %v479 = vunpack.c.l.b16 %v408
    %v480 = vunpack.c.l.b16 %v409
    %v481 = vunpack.c.l.b16 %v410
    %v482 = vunpack.c.l.b16 %v411
    %v483 = vunpack.c.l.b16 %v412
    %v484 = vunpack.c.l.b16 %v413
    %v485 = vunpack.c.l.b16 %v414
    %v486 = vunpack.c.l.b16 %v415
    %v487 = vunpack.c.l.b16 %v416
    %v488 = vunpack.c.l.b16 %v417
    %v489 = vpack.c.b16 %v458, %v457
    %v490 = vpack.c.b16 %v460, %v459
    %v491 = vpack.c.b16 %v462, %v461
    %v492 = vpack.c.b16 %v464, %v463
    %v493 = vpack.c.b16 %v466, %v465
    %v494 = vpack.c.b16 %v468, %v467
    %v495 = vpack.c.b16 %v470, %v469
    %v496 = vpack.c.b16 %v472, %v471
    %v497 = vpack.c.b16 %v474, %v473
    %v498 = vpack.c.b16 %v476, %v475
    %v499 = vpack.c.b16 %v478, %v477
    %v500 = vpack.c.b16 %v480, %v479
    %v501 = vpack.c.b16 %v482, %v481
    %v502 = vpack.c.b16 %v484, %v483
    %v503 = vpack.c.b16 %v486, %v485
    %v504 = vpack.c.b16 %v488, %v487
    %521 = vmatprep.subr.bf16.mxu0 0
    %522 = vmatpush1.bf16.msra.mxu0 %v489
    %523 = vmatprep.subr.bf16.mxu0 0
    %524 = vmatpush1.bf16.msra.mxu0 %v490
    %525 = vmatprep.subr.bf16.mxu0 0
    %526 = vmatpush1.bf16.msra.mxu0 %v491
    %527 = vmatprep.subr.bf16.mxu0 0
    %528 = vmatpush1.bf16.msra.mxu0 %v492
    %529 = vmatprep.subr.bf16.mxu0 0
    %530 = vmatpush1.bf16.msra.mxu0 %v493
    %531 = vmatprep.subr.bf16.mxu0 0
    %532 = vmatpush1.bf16.msra.mxu0 %v494
    %533 = vmatprep.subr.bf16.mxu0 0
    %534 = vmatpush1.bf16.msra.mxu0 %v495
    %535 = vmatprep.subr.bf16.mxu0 0
    %536 = vmatpush1.bf16.msra.mxu0 %v496
    %537 = vmatprep.subr.bf16.mxu0 0
    %538 = vmatpush1.bf16.msra.mxu0 %v497
    %539 = vmatprep.subr.bf16.mxu0 0
    %540 = vmatpush1.bf16.msra.mxu0 %v498
    %541 = vmatprep.subr.bf16.mxu0 0
    %542 = vmatpush1.bf16.msra.mxu0 %v499
    %543 = vmatprep.subr.bf16.mxu0 0
    %544 = vmatpush1.bf16.msra.mxu0 %v500
    %545 = vmatprep.subr.bf16.mxu0 0
    %546 = vmatpush1.bf16.msra.mxu0 %v501
    %547 = vmatprep.subr.bf16.mxu0 0
    %548 = vmatpush1.bf16.msra.mxu0 %v502
    %549 = vmatprep.subr.bf16.mxu0 0
    %550 = vmatpush1.bf16.msra.mxu0 %v503
    %551 = vmatprep.subr.bf16.mxu0 0
    %552 = vmatpush1.bf16.msra.mxu0 %v504
    %553 = vmatprep.mubr.bf16.mxu0 %v385
    %554 = vmatmul.mubr.bf16.gmra.mrb[0].mxu0 %v384
    %v555 = vpop.f32.mrb[0].mxu0
    %v556 = vadd.f32 %v423, %v555
    %v557 = vpop.f32.mrb[0].mxu0
    %v558 = vpop.f32.mrb[0].mxu0
    %v559 = vadd.f32 %v423, %v558
    %v560 = vpop.f32.mrb[0].mxu0
    %561 = vdwg.mxu0
    %vm562 = vcmask 64512
    %v563 = vsel %vm562, %v556, -inf
    %564 = vmax.xlane.f32.xlu0 %v563
    %v565 = vpop.xlane.xlu0 %564
    %v566 = vsel %vm562, %v559, -inf
    %567 = vmax.xlane.f32.xlu0 %v566
    %v568 = vpop.xlane.xlu0 %567
    %v569 = vsub.f32 %v556, %v565
    %v570 = vsub.f32 %v559, %v568
    %v571 = vmul.f32 %v569, 1.442695
    %v572 = vpow.pop %v571
    %v573 = vmul.f32 %v570, 1.442695
    %v574 = vpow.pop %v573
    %v575 = vsel %vm562, %v572, 0.0
    %576 = vadd.xlane.f32.xlu0 %v575
    %v577 = vpop.xlane.xlu0 %576
    %v578 = vsel %vm562, %v574, 0.0
    %579 = vadd.xlane.f32.xlu0 %v578
    %v580 = vpop.xlane.xlu0 %579
    %v581 = vrcp.pop %v577
    %v582 = vmul.f32 %v572, %v581
    %v583 = vrcp.pop %v580
    %v584 = vmul.f32 %v574, %v583
    %585 = vst.msk [vmem:[%s7] sm:$0xff] %vm562, %v582
    %586 = vst.msk [vmem:[%s7 + $0x8] sm:$0xff] %vm562, %v584
    // Predicated region
    $region34: #{actor_forward.1} parent=1 // pred_check
      _
    $region35: #{actor_forward.1} parent=1 // pred_check_branch
      %588 = sbr.rel (0) target = $region37
    $region36: #{actor_forward.1} parent=1 // pred_region
      _
    $region37: #{actor_forward.1} parent=1 // pred_fallthru
      _
    // Predicated region
    $region38: #{actor_forward.1} parent=1 // pred_check
      _
    $region39: #{actor_forward.1} parent=1 // pred_check_branch
      %590 = sbr.rel (0) target = $region41
    $region40: #{actor_forward.1} parent=1 // pred_region
      _
    $region41: #{actor_forward.1} parent=1 // pred_fallthru
      _
    %591 = vsyncpa [#allocation3], 1

</llo_original>
